<compile_context>
chip_gen: v7x
topology: tpu7x:2x2x1
jax: 0.10.0
libtpu: 0.0.40
codegen_flags: <defaults>
</compile_context>

<pallas_src>
import functools
import numpy as np
import jax
import jax.numpy as jnp
from jax.experimental import pallas as pl
from jax.experimental.pallas import tpu as pltpu


# ---------------------------------------------------------------------------
# BatchNorm (eval) folding -> per-channel scale / bias
# ---------------------------------------------------------------------------

def bn_fold(gamma, beta, mean, var, conv_bias=None, eps=1e-5):
    scale = gamma / jnp.sqrt(var + eps)
    bias = beta - mean * scale
    if conv_bias is not None:
        bias = bias + conv_bias * scale
    return scale, bias


# ---------------------------------------------------------------------------
# Fused Pallas kernel: whole UPDeconv forward for one batch element.
# Layout: channel-major -- activations are (C, M), M = H2*W2 pixels on lanes.
# ---------------------------------------------------------------------------

def _fused_updeconv_kernel(xu_ref, enc_ref, w_ref, out_ref, *, cfg):
    f32, bf16 = jnp.float32, jnp.bfloat16
    oup, W2, M = cfg["oup"], cfg["W2"], cfg["M"]
    offs = cfg["offs"]

    def w(name):                       # static slice into the packed buffer
        r0, r, c = offs[name]
        return w_ref[r0:r0 + r, 0:c]

    def roll_amt(s):                   # lane shift so that shifted[m] == h[m + s]
        return (-s) % M if cfg["roll_jnp"] else s % M

    xu = xu_ref[0].astype(bf16)        # (Cin_up, M) nearest-2x-upsampled x
    enc = enc_ref[0].astype(bf16)      # (Cenc,  M) encoder feature

    # --- ConvTranspose2d(k=2, s=2): one matmul covering all 4 weight phases,
    #     then a compile-time one-hot phase mask keeps the right phase per lane.
    u_all = jnp.dot(w("up_w").astype(bf16), xu, preferred_element_type=f32)   # (4*oup, M)
    u_all = u_all * w("phase")
    up = (u_all[0 * oup:1 * oup] + u_all[1 * oup:2 * oup]
          + u_all[2 * oup:3 * oup] + u_all[3 * oup:4 * oup]) + w("up_b")      # (oup, M)
    up_bf = up.astype(bf16)

    # --- conv1x1 + folded BN residual branch on the implicit concat([up, enc])
    res = (jnp.dot(w("c11_wu").astype(bf16), up_bf, preferred_element_type=f32)
           + jnp.dot(w("c11_we").astype(bf16), enc, preferred_element_type=f32))
    res = res * w("c11_s") + w("c11_b")

    # --- DW3x3 boundary-validity masks (identical for every block) -- hoisted
    dw_masks = {(di, dj): w(f"dwm_{di}{dj}")
                for di in range(3) for dj in range(3) if (di, dj) != (1, 1)}

    # --- InvertedResidual stack, fully vreg/VMEM resident
    y = None
    for bi, bc in enumerate(cfg["blocks"]):
        # expand 1x1 + BN + ReLU6
        if bc["split"]:                # block 0 consumes the (up, enc) pair
            h = (jnp.dot(w(f"b{bi}_exp_wu").astype(bf16), up_bf,
                         preferred_element_type=f32)
                 + jnp.dot(w(f"b{bi}_exp_we").astype(bf16), enc,
                           preferred_element_type=f32))
        else:
            h = jnp.dot(w(f"b{bi}_exp_w").astype(bf16), y.astype(bf16),
                        preferred_element_type=f32)
        h = jnp.clip(h * w(f"b{bi}_exp_s") + w(f"b{bi}_exp_b"), 0.0, 6.0)     # (hidden, M)

        # depthwise 3x3 (stride 1, pad 1): 8 lane rolls (XLU) + masks + 9 MACs
        dw = w(f"b{bi}_dw")                                                   # (hidden, 9)
        acc = h * dw[:, 4:5]                                                  # centre tap
        for di in range(3):
            for dj in range(3):
                if (di, dj) == (1, 1):
                    continue
                s = (di - 1) * W2 + (dj - 1)
                shifted = pltpu.roll(h, roll_amt(s), 1)
                acc = acc + (shifted * dw_masks[(di, dj)]) \
                    * dw[:, di * 3 + dj:di * 3 + dj + 1]
        h = acc * w(f"b{bi}_dw_s") + w(f"b{bi}_dw_b")

        # SE: lane-reduce pool + tiny FCs on VPU/XLU (no 1-column MXU matmuls)
        pooled = jnp.sum(h, axis=1, keepdims=True) * (1.0 / M)                # (hidden, 1)
        a1 = jnp.maximum(
            jnp.sum(w(f"b{bi}_se1") * pooled, axis=0, keepdims=True), 0.0)    # (1, h/4)
        gate = jnp.sum(w(f"b{bi}_se2") * a1, axis=1, keepdims=True)           # (hidden, 1)
        gate = jnp.clip(gate + 3.0, 0.0, 6.0) * (1.0 / 6.0)
        h = jnp.clip(h * gate, 0.0, 6.0)

        # project 1x1 + BN (+ identity residual)
        p = jnp.dot(w(f"b{bi}_proj").astype(bf16), h.astype(bf16),
                    preferred_element_type=f32)
        p = p * w(f"b{bi}_proj_s") + w(f"b{bi}_proj_b")
        y = (y + p) if bc["identity"] else p

    out_ref[0] = res + y                                                      # (oup, M)


# ---------------------------------------------------------------------------
# Parameter setup (deterministic, synthetic)
# ---------------------------------------------------------------------------

def make_params(key, up_sample_inp, de_invert_inp, oup, expand_ratio, inverted_n):
    # TODO(synk): the expand_ratio == 1 InvertedResidual variant (no expand conv)
    # is not implemented; the chosen config uses the expand branch.
    assert expand_ratio != 1
    keys = iter(jax.random.split(key, 128))

    def nrm(shape, s=0.2):
        return jax.random.normal(next(keys), shape, jnp.float32) * s

    def bn(c):
        return dict(gamma=1.0 + 0.1 * nrm((c,)),
                    beta=nrm((c,)),
                    mean=nrm((c,)),
                    var=jax.random.uniform(next(keys), (c,), jnp.float32, 0.5, 1.5))

    p = {}
    p["up_w"] = nrm((up_sample_inp, 2, 2, oup))   # deconv weight [cin, kh, kw, cout]
    p["up_b"] = nrm((oup,))
    p["c11_w"] = nrm((de_invert_inp, oup)); p["c11_b"] = nrm((oup,)); p["c11_bn"] = bn(oup)
    blocks = []
    inp = de_invert_inp
    for _ in range(inverted_n):
        hidden = int(round(inp * expand_ratio))
        blocks.append(dict(
            hidden=hidden, identity=(inp == oup),
            exp_w=nrm((inp, hidden)), exp_bn=bn(hidden),
            dw_w=nrm((3, 3, hidden)), dw_bn=bn(hidden),
            se_w1=nrm((hidden, hidden // 4)), se_w2=nrm((hidden // 4, hidden)),
            proj_w=nrm((hidden, oup)), proj_bn=bn(oup),
        ))
        inp = oup
    p["blocks"] = blocks
    return p


def _roll_direction_is_jnp_like():
    """One-time probe of pltpu.roll's rotation convention (defensive; runs once)."""
    x = jnp.arange(8 * 128, dtype=jnp.float32).reshape(8, 128)

    def k(x_ref, o_ref):
        o_ref[...] = pltpu.roll(x_ref[...], 1, 1)

    y = pl.pallas_call(k, out_shape=jax.ShapeDtypeStruct((8, 128), jnp.float32))(x)
    return bool(np.asarray(y)[0, 1] == 0.0)      # jnp.roll semantics: out[:,1] == in[:,0]


def prepare_kernel_params(params, oup, H2, W2):
    """Fold BN, transpose weights to channel-major, and pack EVERYTHING
    (weights, folded scale/bias, deconv phase mask, DW masks) into ONE buffer."""
    M = H2 * W2
    width = max(128, M)
    entries, offs = [], {}

    def add(name, arr):
        arr = np.asarray(arr, np.float32)
        assert arr.ndim == 2 and arr.shape[1] <= width, (name, arr.shape)
        entries.append((name, arr))

    def fold(bn, conv_bias=None):
        s, b = bn_fold(**bn, conv_bias=conv_bias)
        return (np.asarray(s, np.float32).reshape(-1, 1),
                np.asarray(b, np.float32).reshape(-1, 1))

    # deconv: W_all[p*oup + o, cin] = up_w[cin, dr, dc, o],  p = dr*2 + dc
    up_w = np.asarray(params["up_w"], np.float32)
    add("up_w", np.transpose(up_w, (1, 2, 3, 0)).reshape(4 * oup, up_w.shape[0]))
    add("up_b", np.asarray(params["up_b"], np.float32).reshape(oup, 1))

    # compile-time lane constants: deconv phase one-hot + DW3x3 validity masks
    rr, cc = np.arange(M) // W2, np.arange(M) % W2
    phase = np.eye(4, dtype=np.float32)[(rr % 2) * 2 + (cc % 2)].T            # (4, M)
    add("phase", np.repeat(phase, oup, axis=0))                               # (4*oup, M)
    for di in range(3):
        for dj in range(3):
            if (di, dj) == (1, 1):
                continue
            dr, dc = di - 1, dj - 1
            valid = ((rr + dr >= 0) & (rr + dr < H2) &
                     (cc + dc >= 0) & (cc + dc < W2))
            add(f"dwm_{di}{dj}", valid.astype(np.float32).reshape(1, M))

    c11_w = np.asarray(params["c11_w"], np.float32)
    add("c11_wu", c11_w[:oup].T)
    add("c11_we", c11_w[oup:].T)
    s_, b_ = fold(params["c11_bn"], params["c11_b"])
    add("c11_s", s_); add("c11_b", b_)

    blocks_cfg = []
    for bi, blk in enumerate(params["blocks"]):
        split = (bi == 0)                 # block 0 consumes the (up, enc) pair
        assert not (split and blk["identity"])
        hidden = blk["hidden"]
        exp_w = np.asarray(blk["exp_w"], np.float32)
        if split:
            add(f"b{bi}_exp_wu", exp_w[:oup].T)
            add(f"b{bi}_exp_we", exp_w[oup:].T)
        else:
            add(f"b{bi}_exp_w", exp_w.T)
        s_, b_ = fold(blk["exp_bn"]); add(f"b{bi}_exp_s", s_); add(f"b{bi}_exp_b", b_)
        add(f"b{bi}_dw",
            np.asarray(blk["dw_w"], np.float32).transpose(2, 0, 1).reshape(hidden, 9))
        s_, b_ = fold(blk["dw_bn"]); add(f"b{bi}_dw_s", s_); add(f"b{bi}_dw_b", b_)
        add(f"b{bi}_se1", np.asarray(blk["se_w1"], np.float32))               # (hidden, h/4)
        add(f"b{bi}_se2", np.asarray(blk["se_w2"], np.float32).T)             # (hidden, h/4)
        add(f"b{bi}_proj", np.asarray(blk["proj_w"], np.float32).T)           # (oup, hidden)
        s_, b_ = fold(blk["proj_bn"]); add(f"b{bi}_proj_s", s_); add(f"b{bi}_proj_b", b_)
        blocks_cfg.append(dict(hidden=hidden, identity=bool(blk["identity"]),
                               split=split))

    # pack: every entry starts on an 8-row (sublane-tile) boundary
    rows = 0
    for name, arr in entries:
        offs[name] = (rows, arr.shape[0], arr.shape[1])
        rows += -(-arr.shape[0] // 8) * 8
    buf = np.zeros((rows, width), np.float32)
    for name, arr in entries:
        r0, r, c = offs[name]
        buf[r0:r0 + r, :c] = arr

    cfg = dict(oup=oup, H2=H2, W2=W2, M=M, offs=offs, blocks=blocks_cfg,
               roll_jnp=_roll_direction_is_jnp_like())
    return jnp.asarray(buf), cfg


# ---------------------------------------------------------------------------
# Forward wrapper (NCHW in / NCHW out) -- no transposes, only reshapes
# ---------------------------------------------------------------------------

def updeconv_forward_pallas(wbuf, cfg, encoder_feature_nchw, x_nchw):
    B, Cu, H, W = x_nchw.shape
    _, Ce, H2, W2 = encoder_feature_nchw.shape
    assert (H2, W2) == (2 * H, 2 * W)
    assert (cfg["H2"], cfg["W2"]) == (H2, W2)
    M = H2 * W2
    oup = cfg["oup"]

    # NCHW is already channel-major; nearest-2x repeat of the tiny x input only.
    xu = jnp.repeat(jnp.repeat(x_nchw.astype(jnp.float32), 2, axis=2), 2, axis=3)
    xu = xu.reshape(B, Cu, M)
    enc = encoder_feature_nchw.astype(jnp.float32).reshape(B, Ce, M)

    kernel = functools.partial(_fused_updeconv_kernel, cfg=cfg)
    out = pl.pallas_call(
        kernel,
        out_shape=jax.ShapeDtypeStruct((B, oup, M), jnp.float32),
        grid=(B,),
        in_specs=[
            pl.BlockSpec((1, Cu, M), lambda b: (b, 0, 0)),
            pl.BlockSpec((1, Ce, M), lambda b: (b, 0, 0)),
            pl.BlockSpec(wbuf.shape, lambda b: (0, 0)),   # single packed weight DMA
        ],
        out_specs=pl.BlockSpec((1, oup, M), lambda b: (b, 0, 0)),
        compiler_params=pltpu.CompilerParams(dimension_semantics=("parallel",)),
    )(xu, enc, wbuf)

    return out.reshape(B, oup, H2, W2)        # (B, oup, M) is already NCHW order


# ---------------------------------------------------------------------------
# Pure-JAX reference (same math, no Pallas)
# ---------------------------------------------------------------------------

def ref_forward(params, encoder_feature_nchw, x_nchw, oup):
    x = jnp.transpose(x_nchw, (0, 2, 3, 1)).astype(jnp.float32)
    enc = jnp.transpose(encoder_feature_nchw, (0, 2, 3, 1)).astype(jnp.float32)
    B, H, W, _ = x.shape
    H2, W2 = 2 * H, 2 * W

    # ConvTranspose2d(kernel=2, stride=2, pad=0) with bias
    up = jnp.einsum("bhwc,cpqo->bhpwqo", x, params["up_w"]).reshape(B, H2, W2, oup)
    up = up + params["up_b"]

    concat = jnp.concatenate([up, enc], axis=-1)

    s, b = bn_fold(**params["c11_bn"], conv_bias=params["c11_b"])
    res = jnp.einsum("bhwc,co->bhwo", concat, params["c11_w"]) * s + b

    y = concat
    for blk in params["blocks"]:
        block_in = y
        s, b = bn_fold(**blk["exp_bn"])
        h = jnp.clip(jnp.einsum("bhwc,cd->bhwd", y, blk["exp_w"]) * s + b, 0.0, 6.0)
        hp = jnp.pad(h, ((0, 0), (1, 1), (1, 1), (0, 0)))
        acc = 0.0
        for di in range(3):
            for dj in range(3):
                acc = acc + hp[:, di:di + H2, dj:dj + W2, :] * blk["dw_w"][di, dj]
        s, b = bn_fold(**blk["dw_bn"])
        h = acc * s + b
        pooled = jnp.mean(h, axis=(1, 2))
        a1 = jnp.maximum(pooled @ blk["se_w1"], 0.0)
        gate = jnp.clip(a1 @ blk["se_w2"] + 3.0, 0.0, 6.0) / 6.0
        h = jnp.clip(h * gate[:, None, None, :], 0.0, 6.0)
        s, b = bn_fold(**blk["proj_bn"])
        h = jnp.einsum("bhwd,do->bhwo", h, blk["proj_w"]) * s + b
        y = block_in + h if blk["identity"] else h

    return jnp.transpose(res + y, (0, 3, 1, 2))


# ---------------------------------------------------------------------------

if __name__ == "__main__":
    up_sample_inp, de_invert_inp, oup = 8, 16, 8
    expand_ratio, inverted_n = 2, 2
    B, H, W = 2, 8, 8

    key = jax.random.PRNGKey(0)
    kp, kx, ke = jax.random.split(key, 3)
    params = make_params(kp, up_sample_inp, de_invert_inp, oup, expand_ratio, inverted_n)
    # BN folding, channel-major transposes, mask construction and weight packing
    # all happen ONCE here, outside the jitted forward.
    wbuf, cfg = prepare_kernel_params(params, oup, 2 * H, 2 * W)

    x = jax.random.normal(kx, (B, up_sample_inp, H, W), jnp.float32)                  # NCHW
    enc = jax.random.normal(ke, (B, de_invert_inp - oup, 2 * H, 2 * W), jnp.float32)  # NCHW

    fwd = jax.jit(lambda e, xx: updeconv_forward_pallas(wbuf, cfg, e, xx))
    out = jax.block_until_ready(fwd(enc, x))

    ref = ref_forward(params, enc, x, oup)
    # 2e-2 tolerance: kernel feeds the MXU with bf16 operands (f32 accumulate),
    # reference runs f32 XLA einsums; structural bugs would produce O(0.1+) errors.
    np.testing.assert_allclose(np.asarray(out), np.asarray(ref), rtol=2e-2, atol=2e-2)
    assert out.shape == (B, oup, 2 * H, 2 * W)
    print("KERNEL_OK")
</pallas_src>

<mosaic_0001>
module attributes {stable_mosaic.version = 11 : i64} {
  func.func @k(%arg0: memref<8x128xf32, #tpu.memory_space<vmem>>, %arg1: memref<8x128xf32, #tpu.memory_space<vmem>>) attributes {dimension_semantics = [], scalar_prefetch = 0 : i64, scratch_operands = 0 : i64, tpu.core_type = #tpu.core_type<tc>} {
    %c0 = arith.constant 0 : index
    %c0_0 = arith.constant 0 : index
    %0 = vector.load %arg0[%c0, %c0_0] : memref<8x128xf32, #tpu.memory_space<vmem>>, vector<8x128xf32>
    %c1_i32 = arith.constant 1 : i32
    %1 = tpu.dynamic_rotate %0 by %c1_i32 dim 1 : vector<8x128xf32>, i32 -> vector<8x128xf32>
    %c0_1 = arith.constant 0 : index
    %c0_2 = arith.constant 0 : index
    %2 = vector.load %arg1[%c0_1, %c0_2] : memref<8x128xf32, #tpu.memory_space<vmem>>, vector<8x128xf32>
    tpu.vector_store %arg1[%c0_1, %c0_2], %1 {strides = array<i32>} : memref<8x128xf32, #tpu.memory_space<vmem>>, vector<8x128xf32>,
    return
  }
}

</mosaic_0001>

<llo_original>
// kernel: tpu_custom_call.1
$region0: #{tpu_custom_call.1}
  #allocation0 [shape = 'u32[]', space=smem, size = 0x4, offset = 0x4, fixed_abs, tag = 'smem constant byte address 0x4 - core index']
  #allocation1 [shape = 'u32[144,128]{1,0:T(1,128)}', space=vmem, size = 0x12000, scoped, tag = 'internal scratch']
  %s0 = inlined_call_operand.hbm [shape: f32[8,128], index: 0, kind: input, shape index: {}]
  %s1 = inlined_call_operand.hbm [shape: f32[8,128], index: 1, kind: output, shape index: {}]
  %s2 = sld [smem:[#allocation0]]
  $region18: #{tpu_custom_call.1} parent=0
    _
  %s4 = ssub.s32 1, %s2
  %s5 = scalar_select 0, %s4, %s2
  $region1: #{tpu_custom_call.1} parent=0
    #allocation2 [shape = 'u8[4096]{0}', space=vmem, size = 0x1000, scoped, tag = 'input window, operand 0, single buffered']
    #allocation3 [shape = 's32[1]{0}', space=sflag, size = 0x4, scoped, tag = 'scoped memory for tpu_custom_call.1']
    #allocation4 [shape = 's32[1]{0}', space=sflag, size = 0x4, scoped, tag = 'scoped memory for tpu_custom_call.1']
    #allocation5 [shape = 'u8[4096]{0}', space=vmem, size = 0x1000, scoped, tag = 'output window, operand 0, single buffered']
    %6 = vsyncpa [#allocation3], 0
    %7 = vsyncpa [#allocation4], 0
    // Predicated region
    $region2: #{tpu_custom_call.1} parent=1 // pred_check
      _
    $region3: #{tpu_custom_call.1} parent=1 // pred_check_branch
      %9 = sbr.rel (0) target = $region5
    $region4: #{tpu_custom_call.1} parent=1 // pred_region
      %s11 = ssub.s32 128, 128
      %12 = vsyncadd [#allocation3], %s11
      %s14 = sshll.u32 [#allocation2], 4
      %s15 = int_to_ptr.vmem [resolvable:$true] %s14
      %17 = dma.hbm_to_vmem [thread:$0]  %s0, 128, %s15, [#allocation3]
    $region5: #{tpu_custom_call.1} parent=1 // pred_fallthru
      _
    // Predicated region
    $region6: #{tpu_custom_call.1} parent=1 // pred_check
      _
    $region7: #{tpu_custom_call.1} parent=1 // pred_check_branch
      %19 = sbr.rel (0) target = $region9
    $region8: #{tpu_custom_call.1} parent=1 // pred_region
      %20 = dma.done [#allocation3], 128
    $region9: #{tpu_custom_call.1} parent=1 // pred_fallthru
      _
    %v21 = vld [vmem:[#allocation2] sm:$0xff]
    %22 = vrot.lane.b32.xlu0 %v21, 1
    %v23 = vpop.permute.xlu0 %22
    %24 = vst [vmem:[#allocation5] sm:$0xff] %v23
    // Predicated region
    $region10: #{tpu_custom_call.1} parent=1 // pred_check
      _
    $region11: #{tpu_custom_call.1} parent=1 // pred_check_branch
      %26 = sbr.rel (0) target = $region13
    $region12: #{tpu_custom_call.1} parent=1 // pred_region
      %s28 = ssub.s32 128, 128
      %29 = vsyncadd [#allocation4], %s28
      %s31 = sshll.u32 [#allocation5], 4
      %s32 = int_to_ptr.vmem [resolvable:$true] %s31
      %34 = dma.vmem_to_hbm [thread:$0]  %s32, 128, %s1, [#allocation4]
    $region13: #{tpu_custom_call.1} parent=1 // pred_fallthru
      _
    // Predicated region
    $region14: #{tpu_custom_call.1} parent=1 // pred_check
      _
    $region15: #{tpu_custom_call.1} parent=1 // pred_check_branch
      %36 = sbr.rel (0) target = $region17
    $region16: #{tpu_custom_call.1} parent=1 // pred_region
      %37 = dma.done [#allocation4], 128
    $region17: #{tpu_custom_call.1} parent=1 // pred_fallthru
      _
    %38 = vsyncpa [#allocation3], 1
    %39 = vsyncpa [#allocation4], 1

</llo_original>
